<compile_context>
chip_gen: v5e
topology: v5e:2x2
jax: 0.10.0
libtpu: 0.0.40
codegen_flags: <defaults>
</compile_context>

<pallas_src>
import math

import jax
import jax.numpy as jnp
from jax import lax
from jax.experimental import pallas as pl
from jax.experimental.pallas import tpu as pltpu


def _roll_static(x, shift, axis):
    """Static circular roll via slice + concat (lowers to XLU/copy work)."""
    n = x.shape[axis]
    shift = shift % n
    if shift == 0:
        return x
    lo = lax.slice_in_dim(x, n - shift, n, axis=axis)
    hi = lax.slice_in_dim(x, 0, n - shift, axis=axis)
    return lax.concatenate([lo, hi], dimension=axis)


def _token_conv_kernel(x_ref, w_ref, o_ref, p_ref):
    # x_ref : (1, L, S, C)     activation tile for one batch row (VMEM)
    # w_ref : (K_pad, TD)      im2col weight tile (tap-major, channel-minor, K zero-padded)
    # o_ref : (1, L*S, TD)     lane-dense output tile (TD multiple of 128)
    # p_ref : (L*S, K_pad)     persistent patch scratch (rebuilt once per batch row)
    _, L, S, C = x_ref.shape
    LS, K_pad = p_ref.shape

    # Build the im2col patch slab only on the first d_model step of this batch
    # row; all later ("arbitrary"-axis) d_model steps reuse it from scratch VMEM.
    @pl.when(pl.program_id(1) == 0)
    def _build_patches():
        x = x_ref[0]                                   # (L, S, C)
        taps = []
        for dl in range(3):                            # circular wrap along L
            xl = _roll_static(x, 1 - dl, axis=0)
            for ds in range(3):                        # circular wrap along S
                taps.append(_roll_static(xl, 1 - ds, axis=1))
        if K_pad > 9 * C:                              # zero-fill K padding lanes
            taps.append(jnp.zeros((L, S, K_pad - 9 * C), x.dtype))
        # Single full-width (unmasked) store of the lane-dense patch slab.
        p_ref[...] = jnp.concatenate(taps, axis=-1).reshape(LS, K_pad)

    # One MXU matmul per (batch row, d_model tile); f32 accumulation.
    o_ref[0] = jnp.dot(p_ref[...], w_ref[...],
                       preferred_element_type=jnp.float32).astype(o_ref.dtype)


def token_embedding_forward(x, w_oihw, *, compute_dtype=None, d_tile=None):
    """TokenEmbedding.forward.

    x      : [B, L, S, C_in]        (the tensor the PyTorch module receives)
    w_oihw : [d_model, C_in, 3, 3]  (PyTorch Conv2d weight, OIHW)
    compute_dtype: optional MXU operand dtype (jnp.bfloat16 on v6e/v7x);
                   accumulation stays f32, output keeps x.dtype.
    d_tile : output tile width; default 256 if d_model pads to a multiple of
             256 (v6e/v7x MXU width), else 128 (use 128 on v5e).
    returns: [B, L, S, d_model]
    """
    B, L, S, C = x.shape
    D = w_oihw.shape[0]
    out_dtype = x.dtype
    LS = L * S

    if compute_dtype is not None:
        x = x.astype(compute_dtype)
    cdtype = x.dtype

    # Weight: OIHW (D, C, kh, kw) -> (kw, kh, C, D) -> (9*C, D).  The kh<->kw swap
    # absorbs the module's two spatial permutes, so the activation is consumed
    # directly in [B, L, S, C] layout (no HBM transposes).
    w2 = jnp.transpose(w_oihw, (3, 2, 1, 0)).reshape(9 * C, D).astype(cdtype)

    # Lane-dense tiling: pad d_model to a multiple of d_tile and the contraction
    # axis to a multiple of 128 (extra weight rows are zero; the kernel zero-fills
    # the matching patch lanes, so no extra MXU passes are spent).
    Dp128 = pl.cdiv(D, 128) * 128
    if d_tile is None:
        d_tile = 256 if Dp128 % 256 == 0 else 128
    Dp = pl.cdiv(D, d_tile) * d_tile
    K9 = 9 * C
    K_pad = pl.cdiv(K9, 128) * 128
    if (Dp != D) or (K_pad != K9):
        w2 = jnp.pad(w2, ((0, K_pad - K9), (0, Dp - D)))
    nd = Dp // d_tile

    # Explicit VMEM budget (default scoped limit is 16/32 MiB; raise it from the
    # actual buffer sizes with headroom; per-step footprint is one batch row).
    csz = jnp.dtype(cdtype).itemsize
    osz = jnp.dtype(out_dtype).itemsize
    buf_bytes = (2 * L * S * C * csz          # x tile, double-buffered
                 + 2 * K_pad * d_tile * csz   # weight tile, double-buffered
                 + 2 * LS * d_tile * osz      # output tile, double-buffered
                 + 2 * LS * K_pad * csz)      # patch scratch + in-register patch temp
    vmem_limit = int(max(32 << 20, min(96 << 20, 2 * buf_bytes + (2 << 20))))

    out = pl.pallas_call(
        _token_conv_kernel,
        out_shape=jax.ShapeDtypeStruct((B, LS, Dp), out_dtype),
        grid=(B, nd),
        in_specs=[
            pl.BlockSpec((1, L, S, C), lambda b, j: (b, 0, 0, 0)),   # one batch row
            pl.BlockSpec((K_pad, d_tile), lambda b, j: (0, j)),      # weight D-tile
        ],
        out_specs=pl.BlockSpec((1, LS, d_tile), lambda b, j: (b, 0, j)),
        scratch_shapes=[
            pltpu.VMEM((LS, K_pad), cdtype),   # im2col patches (persist over d axis)
        ],
        compiler_params=pltpu.CompilerParams(
            dimension_semantics=("parallel", "arbitrary"),
            vmem_limit_bytes=vmem_limit),
        cost_estimate=pl.CostEstimate(
            flops=2 * B * LS * K_pad * Dp,
            transcendentals=0,
            bytes_accessed=int(x.size * csz + w2.size * csz + B * LS * Dp * osz)),
    )(x, w2)

    return out[:, :, :D].reshape(B, L, S, D)


if __name__ == "__main__":
    def reference(x, w_oihw):
        # Reproduce the PyTorch pipeline with XLA: permute -> circular pad ->
        # valid conv -> permute back.  Independently validates the kernel's
        # kh<->kw weight-swap trick and wrap/corner handling.
        x_nchw = jnp.transpose(x, (0, 3, 2, 1))                       # [B, C, S, L]
        x_pad = jnp.pad(x_nchw, ((0, 0), (0, 0), (1, 1), (1, 1)), mode="wrap")
        y = jax.lax.conv_general_dilated(
            x_pad, w_oihw, window_strides=(1, 1), padding="VALID",
            dimension_numbers=("NCHW", "OIHW", "NCHW"))
        return jnp.transpose(y, (0, 3, 2, 1))                         # [B, L, S, D]

    key = jax.random.PRNGKey(0)
    k1, k2, k3, k4 = jax.random.split(key, 4)

    # Case 1: asymmetric spatial dims (L != S) guard the axis-swap trick.
    B, L, S, C_in, d_model = 2, 16, 8, 4, 32
    x = jax.random.normal(k1, (B, L, S, C_in), dtype=jnp.float32)
    # Deterministic synthetic weights (PyTorch default Conv2d init range); the
    # module's kaiming loop targets Conv1d only, so it is a no-op.
    bound = 1.0 / math.sqrt(C_in * 9)
    w = jax.random.uniform(k2, (d_model, C_in, 3, 3), dtype=jnp.float32,
                           minval=-bound, maxval=bound)

    out = jax.block_until_ready(token_embedding_forward(x, w))
    assert out.shape == (B, L, S, d_model), out.shape
    ref = reference(x, w)
    assert jnp.allclose(out, ref, atol=1e-4, rtol=1e-4), \
        float(jnp.max(jnp.abs(out - ref)))

    # bf16 MXU operand path (v6e/v7x); f32 accumulation, looser tolerance.
    out_bf16 = jax.block_until_ready(
        token_embedding_forward(x, w, compute_dtype=jnp.bfloat16))
    assert out_bf16.shape == (B, L, S, d_model)
    assert jnp.allclose(out_bf16, ref, atol=5e-2, rtol=5e-2), \
        float(jnp.max(jnp.abs(out_bf16 - ref)))

    # Case 2: other spatial orientation, C not a power of two, d_model not a
    # multiple of the tile width (exercises the K/D padding + slicing paths).
    B2, L2, S2, C2, D2 = 1, 8, 16, 6, 48
    x2 = jax.random.normal(k3, (B2, L2, S2, C2), dtype=jnp.float32)
    bound2 = 1.0 / math.sqrt(C2 * 9)
    w2_ = jax.random.uniform(k4, (D2, C2, 3, 3), dtype=jnp.float32,
                             minval=-bound2, maxval=bound2)
    out2 = jax.block_until_ready(token_embedding_forward(x2, w2_))
    assert out2.shape == (B2, L2, S2, D2), out2.shape
    ref2 = reference(x2, w2_)
    assert jnp.allclose(out2, ref2, atol=1e-4, rtol=1e-4), \
        float(jnp.max(jnp.abs(out2 - ref2)))

    print("KERNEL_OK")
</pallas_src>

<mosaic_0001>
module attributes {stable_mosaic.version = 11 : i64} {
  func.func @_token_conv_kernel(%arg0: i32, %arg1: i32, %arg2: memref<1x16x8x4xf32, #tpu.memory_space<vmem>>, %arg3: memref<128x128xf32, #tpu.memory_space<vmem>>, %arg4: memref<1x128x128xf32, #tpu.memory_space<vmem>>, %arg5: memref<128x128xf32, #tpu.memory_space<vmem>>) attributes {dimension_semantics = [#tpu.dimension_semantics<parallel>, #tpu.dimension_semantics<arbitrary>], iteration_bounds = array<i64: 2, 1>, scalar_prefetch = 0 : i64, scratch_operands = 1 : i64, tpu.core_type = #tpu.core_type<tc>, window_params = [{transform_indices = @transform_0, window_bounds = array<i64: 1, 16, 8, 4>}, {transform_indices = @transform_1, window_bounds = array<i64: 128, 128>}, {transform_indices = @transform_2, window_bounds = array<i64: 1, 128, 128>}]} {
    %c0_i32 = arith.constant 0 : i32
    %0 = arith.cmpi eq, %arg1, %c0_i32 : i32
    %1 = arith.extui %0 : i1 to i32
    %c0_i32_0 = arith.constant 0 : i32
    %2 = arith.cmpi ne, %1, %c0_i32_0 : i32
    scf.if %2 {
      %c0_7 = arith.constant 0 : index
      %c0_8 = arith.constant 0 : index
      %c0_9 = arith.constant 0 : index
      %c0_10 = arith.constant 0 : index
      %9 = vector.load %arg2[%c0_7, %c0_8, %c0_9, %c0_10] : memref<1x16x8x4xf32, #tpu.memory_space<vmem>>, vector<1x16x8x4xf32>
      %10 = vector.shape_cast %9 : vector<1x16x8x4xf32> to vector<16x8x4xf32>
      %11 = vector.extract_strided_slice %10 {offsets = [15, 0, 0], sizes = [1, 8, 4], strides = [1, 1, 1]} : vector<16x8x4xf32> to vector<1x8x4xf32>
      %12 = vector.extract_strided_slice %10 {offsets = [0, 0, 0], sizes = [15, 8, 4], strides = [1, 1, 1]} : vector<16x8x4xf32> to vector<15x8x4xf32>
      %13 = tpu.concatenate %11, %12 in 0 : vector<1x8x4xf32>, vector<15x8x4xf32> -> vector<16x8x4xf32>
      %14 = vector.extract_strided_slice %13 {offsets = [0, 7, 0], sizes = [16, 1, 4], strides = [1, 1, 1]} : vector<16x8x4xf32> to vector<16x1x4xf32>
      %15 = vector.extract_strided_slice %13 {offsets = [0, 0, 0], sizes = [16, 7, 4], strides = [1, 1, 1]} : vector<16x8x4xf32> to vector<16x7x4xf32>
      %16 = tpu.concatenate %14, %15 in 1 : vector<16x1x4xf32>, vector<16x7x4xf32> -> vector<16x8x4xf32>
      %17 = vector.extract_strided_slice %13 {offsets = [0, 1, 0], sizes = [16, 7, 4], strides = [1, 1, 1]} : vector<16x8x4xf32> to vector<16x7x4xf32>
      %18 = vector.extract_strided_slice %13 {offsets = [0, 0, 0], sizes = [16, 1, 4], strides = [1, 1, 1]} : vector<16x8x4xf32> to vector<16x1x4xf32>
      %19 = tpu.concatenate %17, %18 in 1 : vector<16x7x4xf32>, vector<16x1x4xf32> -> vector<16x8x4xf32>
      %20 = vector.extract_strided_slice %10 {offsets = [0, 7, 0], sizes = [16, 1, 4], strides = [1, 1, 1]} : vector<16x8x4xf32> to vector<16x1x4xf32>
      %21 = vector.extract_strided_slice %10 {offsets = [0, 0, 0], sizes = [16, 7, 4], strides = [1, 1, 1]} : vector<16x8x4xf32> to vector<16x7x4xf32>
      %22 = tpu.concatenate %20, %21 in 1 : vector<16x1x4xf32>, vector<16x7x4xf32> -> vector<16x8x4xf32>
      %23 = vector.extract_strided_slice %10 {offsets = [0, 1, 0], sizes = [16, 7, 4], strides = [1, 1, 1]} : vector<16x8x4xf32> to vector<16x7x4xf32>
      %24 = vector.extract_strided_slice %10 {offsets = [0, 0, 0], sizes = [16, 1, 4], strides = [1, 1, 1]} : vector<16x8x4xf32> to vector<16x1x4xf32>
      %25 = tpu.concatenate %23, %24 in 1 : vector<16x7x4xf32>, vector<16x1x4xf32> -> vector<16x8x4xf32>
      %26 = vector.extract_strided_slice %10 {offsets = [1, 0, 0], sizes = [15, 8, 4], strides = [1, 1, 1]} : vector<16x8x4xf32> to vector<15x8x4xf32>
      %27 = vector.extract_strided_slice %10 {offsets = [0, 0, 0], sizes = [1, 8, 4], strides = [1, 1, 1]} : vector<16x8x4xf32> to vector<1x8x4xf32>
      %28 = tpu.concatenate %26, %27 in 0 : vector<15x8x4xf32>, vector<1x8x4xf32> -> vector<16x8x4xf32>
      %29 = vector.extract_strided_slice %28 {offsets = [0, 7, 0], sizes = [16, 1, 4], strides = [1, 1, 1]} : vector<16x8x4xf32> to vector<16x1x4xf32>
      %30 = vector.extract_strided_slice %28 {offsets = [0, 0, 0], sizes = [16, 7, 4], strides = [1, 1, 1]} : vector<16x8x4xf32> to vector<16x7x4xf32>
      %31 = tpu.concatenate %29, %30 in 1 : vector<16x1x4xf32>, vector<16x7x4xf32> -> vector<16x8x4xf32>
      %32 = vector.extract_strided_slice %28 {offsets = [0, 1, 0], sizes = [16, 7, 4], strides = [1, 1, 1]} : vector<16x8x4xf32> to vector<16x7x4xf32>
      %33 = vector.extract_strided_slice %28 {offsets = [0, 0, 0], sizes = [16, 1, 4], strides = [1, 1, 1]} : vector<16x8x4xf32> to vector<16x1x4xf32>
      %34 = tpu.concatenate %32, %33 in 1 : vector<16x7x4xf32>, vector<16x1x4xf32> -> vector<16x8x4xf32>
      %cst_11 = arith.constant 0.000000e+00 : f32
      %35 = vector.broadcast %cst_11 : f32 to vector<16x8x92xf32>
      %36 = tpu.concatenate %16, %13, %19, %22, %10, %25, %31, %28, %34, %35 in 2 : vector<16x8x4xf32>, vector<16x8x4xf32>, vector<16x8x4xf32>, vector<16x8x4xf32>, vector<16x8x4xf32>, vector<16x8x4xf32>, vector<16x8x4xf32>, vector<16x8x4xf32>, vector<16x8x4xf32>, vector<16x8x92xf32> -> vector<16x8x128xf32>
      %37 = vector.shape_cast %36 : vector<16x8x128xf32> to vector<128x128xf32>
      %c0_12 = arith.constant 0 : index
      %c0_13 = arith.constant 0 : index
      %38 = vector.load %arg5[%c0_12, %c0_13] : memref<128x128xf32, #tpu.memory_space<vmem>>, vector<128x128xf32>
      tpu.vector_store %arg5[%c0_12, %c0_13], %37 {strides = array<i32>} : memref<128x128xf32, #tpu.memory_space<vmem>>, vector<128x128xf32>,
    } else {
    }
    %c0 = arith.constant 0 : index
    %c0_1 = arith.constant 0 : index
    %3 = vector.load %arg5[%c0, %c0_1] : memref<128x128xf32, #tpu.memory_space<vmem>>, vector<128x128xf32>
    %c0_2 = arith.constant 0 : index
    %c0_3 = arith.constant 0 : index
    %4 = vector.load %arg3[%c0_2, %c0_3] : memref<128x128xf32, #tpu.memory_space<vmem>>, vector<128x128xf32>
    %cst = arith.constant dense<0.000000e+00> : vector<128x128xf32>
    %5 = tpu.matmul %3, %4, %cst {dimension_numbers = #tpu.dot_dimension_numbers<[1], [0], [0], [1], [0, 0, 1, 1], [], []>} : vector<128x128xf32>, vector<128x128xf32>, vector<128x128xf32> -> vector<128x128xf32>
    %c0_4 = arith.constant 0 : index
    %c0_5 = arith.constant 0 : index
    %c0_6 = arith.constant 0 : index
    %6 = vector.load %arg4[%c0_4, %c0_5, %c0_6] : memref<1x128x128xf32, #tpu.memory_space<vmem>>, vector<1x128x128xf32>
    %7 = vector.shape_cast %6 : vector<1x128x128xf32> to vector<128x128xf32>
    %8 = vector.shape_cast %5 : vector<128x128xf32> to vector<1x128x128xf32>
    tpu.vector_store %arg4[%c0_4, %c0_5, %c0_6], %8 {strides = array<i32>} : memref<1x128x128xf32, #tpu.memory_space<vmem>>, vector<1x128x128xf32>,
    return
  }
  func.func @transform_0(%arg0: i32, %arg1: i32) -> (i32, i32, i32, i32) {
    %c0_i32 = arith.constant 0 : i32
    %c0_i32_0 = arith.constant 0 : i32
    %c0_i32_1 = arith.constant 0 : i32
    %c0_i32_2 = arith.constant 0 : i32
    return %arg0, %c0_i32, %c0_i32_0, %c0_i32_1 : i32, i32, i32, i32
  }
  func.func @transform_1(%arg0: i32, %arg1: i32) -> (i32, i32) {
    %c0_i32 = arith.constant 0 : i32
    %c0_i32_0 = arith.constant 0 : i32
    return %c0_i32, %arg1 : i32, i32
  }
  func.func @transform_2(%arg0: i32, %arg1: i32) -> (i32, i32, i32) {
    %c0_i32 = arith.constant 0 : i32
    %c0_i32_0 = arith.constant 0 : i32
    return %arg0, %c0_i32, %arg1 : i32, i32, i32
  }
}

</mosaic_0001>

<llo_original>
// kernel: tpu_custom_call.1
$region0: #{tpu_custom_call.1}
  #allocation0 [shape = 'u32[]', space=smem, size = 0x4, offset = 0x4, fixed_abs, tag = 'smem constant byte address 0x4 - core index']
  #allocation1 [shape = 'u32[72,128]{1,0:T(1,128)}', space=vmem, size = 0x9000, scoped, tag = 'internal scratch']
  #allocation2 [shape = 'f32[128,128]{1,0:T(8,128)}', space=vmem, size = 0x10000, scoped, tag = 'scratch operand']
  %s0 = inlined_call_operand.vmem [shape: f32[2,16,8,4], index: 0, kind: input, shape index: {}]
  %s1 = inlined_call_operand.vmem [shape: f32[128,128], index: 1, kind: input, shape index: {}]
  %s2 = inlined_call_operand.hbm [shape: f32[2,128,128], index: 2, kind: output, shape index: {}]
  %s3 = sld [smem:[#allocation0]]
  $region45: #{tpu_custom_call.1} parent=0
    _
  %s5 = ssub.s32 1, %s3
  %s6 = scalar_select 0, %s5, %s3
  $region1: #{tpu_custom_call.1} parent=0
    #allocation3 [shape = 'u8[131072]{0}', space=vmem, size = 0x20000, scoped, tag = 'output window, operand 0']
    #allocation4 [shape = 's32[2]{0}', space=sflag, size = 0x8, scoped, tag = 'scoped memory for tpu_custom_call.1']
    %7 = vsyncpa [#allocation4], 0
    %s8 = scalar_lea.sflag [#allocation4], 1
    %9 = vsyncpa %s8, 0
    loop: start=0, step=1, limit=4
    $region2: #{tpu_custom_call.1} parent=1 // loop_pre_header
      _
    $region3: #{tpu_custom_call.1} parent=1 // loop_header
      %s11 = sphi 0, %s15
      %p12 = scmp.ge.s32.totalorder %s11, 4
      %s18 = sphi 0, %s30
      %s19 = sphi 0, %s26
      %s20 = sphi 0, %s18
      %s21 = sphi 0, %s19
      %s22 = sphi 0, %s20
      %s23 = sphi 0, %s21
      %s33 = sphi 0, %s35
      %s36 = sphi 0, %s33
      %s37 = sphi 0, %s36
      %s53 = sphi 0, %s37
      %s59 = sphi 0, %s61
      %s62 = sphi 0, %s59
      %s63 = sphi 0, %s62
      %s79 = sphi 0, %s63
      %s87 = sphi 0, %s89
      %s90 = sphi 0, %s87
      %s91 = sphi 0, %s90
      %s107 = sphi 0, %s91
    $region4: #{tpu_custom_call.1} parent=1 // loop_header_branch
      %14 = sbr.rel (%p12) target = $region8
    $region5: #{tpu_custom_call.1} parent=1 // loop_body
      %s16 = ssub.s32 %s11, 1
      %s17 = ssub.s32 %s11, 2
      %s24 = sadd.s32 1, %s19
      %p25 = scmp.ge.s32.totalorder %s24, 1
      %s26 = scalar_select %p25, 0, %s24
      %s27 = sadd.s32 1, %s18
      %s28 = scalar_select %p25, %s27, %s18
      %p29 = scmp.ge.s32.totalorder %s28, 2
      %s30 = scalar_select %p29, 0, %s28
      %s31 = ssub.s32 %s18, %s30
      %p32 = scmp.eq.s32.totalorder %s31, 0
      %s34 = sadd.s32 %s33, 1
      %s35 = scalar_select %p32, %s33, %s34
      %p38 = pneg %p32
      %p39 = scmp.eq.s32.totalorder %s11, 1
      %p40 = por %p38, %p39
      %p41 = scmp.ne.s32.totalorder %s33, %s36
      %p42 = scmp.eq.s32.totalorder %s11, 0
      %p43 = por %p41, %p42
      %p44 = scmp.ne.s32.totalorder %s33, %s36
      %p45 = scmp.eq.s32.totalorder %s16, 1
      %p46 = por %p44, %p45
      %p47 = scmp.ne.s32.totalorder %s36, %s37
      %p48 = scmp.eq.s32.totalorder %s16, 0
      %p49 = por %p47, %p48
      %p50 = scmp.ne.s32.totalorder %s36, %s37
      %p51 = scmp.eq.s32.totalorder %s17, 1
      %p52 = por %p50, %p51
      %p54 = scmp.ne.s32.totalorder %s37, %s53
      %p55 = scmp.eq.s32.totalorder %s17, 0
      %p56 = por %p54, %p55
      %s57 = ssub.s32 %s19, %s26
      %p58 = scmp.eq.s32.totalorder %s57, 0
      %s60 = sadd.s32 %s59, 1
      %s61 = scalar_select %p58, %s59, %s60
      %p64 = pneg %p58
      %p65 = scmp.eq.s32.totalorder %s11, 1
      %p66 = por %p64, %p65
      %p67 = scmp.ne.s32.totalorder %s59, %s62
      %p68 = scmp.eq.s32.totalorder %s11, 0
      %p69 = por %p67, %p68
      %p70 = scmp.ne.s32.totalorder %s59, %s62
      %p71 = scmp.eq.s32.totalorder %s16, 1
      %p72 = por %p70, %p71
      %p73 = scmp.ne.s32.totalorder %s62, %s63
      %p74 = scmp.eq.s32.totalorder %s16, 0
      %p75 = por %p73, %p74
      %p76 = scmp.ne.s32.totalorder %s62, %s63
      %p77 = scmp.eq.s32.totalorder %s17, 1
      %p78 = por %p76, %p77
      %p80 = scmp.ne.s32.totalorder %s63, %s79
      %p81 = scmp.eq.s32.totalorder %s17, 0
      %p82 = por %p80, %p81
      %s83 = ssub.s32 %s18, %s30
      %s84 = ssub.s32 %s19, %s26
      %s85 = sor.u32 %s83, %s84
      %p86 = scmp.eq.s32.totalorder %s85, 0
      %s88 = sadd.s32 %s87, 1
      %s89 = scalar_select %p86, %s87, %s88
      %p92 = pneg %p86
      %p93 = scmp.eq.s32.totalorder %s11, 1
      %p94 = por %p92, %p93
      %p95 = scmp.ne.s32.totalorder %s87, %s90
      %p96 = scmp.eq.s32.totalorder %s11, 0
      %p97 = por %p95, %p96
      %p98 = scmp.ne.s32.totalorder %s87, %s90
      %p99 = scmp.eq.s32.totalorder %s16, 1
      %p100 = por %p98, %p99
      %p101 = scmp.ne.s32.totalorder %s90, %s91
      %p102 = scmp.eq.s32.totalorder %s16, 0
      %p103 = por %p101, %p102
      %p104 = scmp.ne.s32.totalorder %s90, %s91
      %p105 = scmp.eq.s32.totalorder %s17, 1
      %p106 = por %p104, %p105
      %p108 = scmp.ne.s32.totalorder %s91, %s107
      %p109 = scmp.eq.s32.totalorder %s17, 0
      %p110 = por %p108, %p109
      %p111 = scmp.le.s32.totalorder 1, %s11
      %p112 = scmp.lt.s32.totalorder %s11, 3
      %p113 = pnand %p111, %p112
      %p114 = pneg %p113
      // Predicated region
      $region9: #{tpu_custom_call.1} parent=5 // pred_check
        _
      $region10: #{tpu_custom_call.1} parent=5 // pred_check_branch
        %116 = sbr.rel (%p113) target = $region12
      $region11: #{tpu_custom_call.1} parent=5 // pred_region
        %s117 = ssub.s32 %s11, 1
        // Predicated region
        $region13: #{tpu_custom_call.1} parent=11 // pred_check
          %p118 = pneg %p75
        $region14: #{tpu_custom_call.1} parent=11 // pred_check_branch
          %120 = sbr.rel (%p118) target = $region16
        $region15: #{tpu_custom_call.1} parent=11 // pred_region
          %p121 = scmp.lt.s32.totalorder %s21, 0
          %s122 = scalar_select %p121, %s21, 0
          %s123 = smul.addr %s122, 8
          %s124 = scalar_lea.vmem %s1, %s123
        $region16: #{tpu_custom_call.1} parent=11 // pred_fallthru
          _
      $region12: #{tpu_custom_call.1} parent=5 // pred_fallthru
        _
      %p125 = scmp.lt.s32.totalorder %s11, 2
      // Predicated region
      $region17: #{tpu_custom_call.1} parent=5 // pred_check
        %p126 = pneg %p125
      $region18: #{tpu_custom_call.1} parent=5 // pred_check_branch
        %128 = sbr.rel (%p126) target = $region20
      $region19: #{tpu_custom_call.1} parent=5 // pred_region
        // Predicated region
        $region21: #{tpu_custom_call.1} parent=19 // pred_check
          %p129 = pneg %p43
        $region22: #{tpu_custom_call.1} parent=19 // pred_check_branch
          %131 = sbr.rel (%p129) target = $region24
        $region23: #{tpu_custom_call.1} parent=19 // pred_region
          %p132 = scmp.lt.s32.totalorder %s18, 1
          %s133 = scalar_select %p132, %s18, 1
          %s134 = smul.addr %s133, 16
          %s135 = smul.addr %s134, 8
          %s136 = scalar_lea.vmem %s0, %s135
        $region24: #{tpu_custom_call.1} parent=19 // pred_fallthru
          _
      $region20: #{tpu_custom_call.1} parent=5 // pred_fallthru
        _
      %p137 = scmp.le.s32.totalorder 1, %s11
      %p138 = scmp.lt.s32.totalorder %s11, 3
      %p139 = pnand %p137, %p138
      %p140 = pneg %p139
      // Predicated region
      $region25: #{tpu_custom_call.1} parent=5 // pred_check
        _
      $region26: #{tpu_custom_call.1} parent=5 // pred_check_branch
        %142 = sbr.rel (%p139) target = $region28
      $region27: #{tpu_custom_call.1} parent=5 // pred_region
        %s143 = ssub.s32 %s11, 1
        %p144 = scmp.lt.s32.totalorder %s20, 1
        %s145 = scalar_select %p144, %s20, 1
        %s146 = smul.addr %s145, 16
        %s147 = smul.addr %s146, 8
        %s148 = scalar_lea.vmem %s0, %s147
        %p149 = pneg %p49
        %p150 = pneg %p46
        %p151 = scmp.lt.s32.totalorder %s21, 0
        %s152 = scalar_select %p151, %s21, 0
        %s153 = smul.addr %s152, 8
        %s154 = scalar_lea.vmem %s1, %s153
        %p155 = pneg %p75
        %p156 = pneg %p72
        %p157 = pneg %p103
        %p158 = pneg %p100
        %s159 = sand.u32 %s90, 1
        %s160 = scalar_lea.sflag [#allocation4], %s159
        %s161 = sand.u32 %s90, 1
        %s162 = smul.addr %s161, 128
        %s163 = scalar_lea.vmem [#allocation3], %s162
        %p164 = scmp.lt.s32.totalorder %s20, 1
        %s165 = scalar_select %p164, %s20, 1
        %s166 = smul.addr %s165, 16
        %s167 = smul.addr %s166, 8
        %s168 = scalar_lea.vmem %s0, %s167
        %p169 = scmp.lt.s32.totalorder %s21, 0
        %s170 = scalar_select %p169, %s21, 0
        %s171 = smul.addr %s170, 8
        %s172 = scalar_lea.vmem %s1, %s171
        %p173 = scmp.eq.s32.totalorder %s21, 0
        // Predicated region
        $region29: #{tpu_custom_call.1} parent=27 // pred_check
          %p174 = pneg %p173
        $region30: #{tpu_custom_call.1} parent=27 // pred_check_branch
          %176 = sbr.rel (%p174) target = $region32
        $region31: #{tpu_custom_call.1} parent=27 // pred_region
          %v177 = vld [vmem:[%s168] sm:$0xff]
          %v178 = vld [vmem:[%s168 + $0x8] sm:$0xff]
          %v179 = vld [vmem:[%s168 + $0x10] sm:$0xff]
          %v180 = vld [vmem:[%s168 + $0x18] sm:$0xff]
          %v181 = vld [vmem:[%s168 + $0x20] sm:$0xff]
          %v182 = vld [vmem:[%s168 + $0x28] sm:$0xff]
          %v183 = vld [vmem:[%s168 + $0x30] sm:$0xff]
          %v184 = vld [vmem:[%s168 + $0x38] sm:$0xff]
          %v185 = vld [vmem:[%s168 + $0x40] sm:$0xff]
          %v186 = vld [vmem:[%s168 + $0x48] sm:$0xff]
          %v187 = vld [vmem:[%s168 + $0x50] sm:$0xff]
          %v188 = vld [vmem:[%s168 + $0x58] sm:$0xff]
          %v189 = vld [vmem:[%s168 + $0x60] sm:$0xff]
          %v190 = vld [vmem:[%s168 + $0x68] sm:$0xff]
          %v191 = vld [vmem:[%s168 + $0x70] sm:$0xff]
          %v192 = vld [vmem:[%s168 + $0x78] sm:$0xff]
          %v209 = vrot.slane %v192, 7
          %v210 = vrot.slane %v177, 7
          %v211 = vrot.slane %v178, 7
          %v212 = vrot.slane %v179, 7
          %v213 = vrot.slane %v180, 7
          %v214 = vrot.slane %v181, 7
          %v215 = vrot.slane %v182, 7
          %v216 = vrot.slane %v183, 7
          %v217 = vrot.slane %v184, 7
          %v218 = vrot.slane %v185, 7
          %v219 = vrot.slane %v186, 7
          %v220 = vrot.slane %v187, 7
          %v221 = vrot.slane %v188, 7
          %v222 = vrot.slane %v189, 7
          %v223 = vrot.slane %v190, 7
          %v224 = vrot.slane %v191, 7
          %vm241 = vcmask 1040384
          %v242 = vsel %vm241, %v209, %v209
          %v243 = vsel %vm241, %v210, %v210
          %v244 = vsel %vm241, %v211, %v211
          %v245 = vsel %vm241, %v212, %v212
          %v246 = vsel %vm241, %v213, %v213
          %v247 = vsel %vm241, %v214, %v214
          %v248 = vsel %vm241, %v215, %v215
          %v249 = vsel %vm241, %v216, %v216
          %v250 = vsel %vm241, %v217, %v217
          %v251 = vsel %vm241, %v218, %v218
          %v252 = vsel %vm241, %v219, %v219
          %v253 = vsel %vm241, %v220, %v220
          %v254 = vsel %vm241, %v221, %v221
          %v255 = vsel %vm241, %v222, %v222
          %v256 = vsel %vm241, %v223, %v223
          %v257 = vsel %vm241, %v224, %v224
          %v258 = vrot.slane %v192, 1
          %v259 = vrot.slane %v177, 1
          %v260 = vrot.slane %v178, 1
          %v261 = vrot.slane %v179, 1
          %v262 = vrot.slane %v180, 1
          %v263 = vrot.slane %v181, 1
          %v264 = vrot.slane %v182, 1
          %v265 = vrot.slane %v183, 1
          %v266 = vrot.slane %v184, 1
          %v267 = vrot.slane %v185, 1
          %v268 = vrot.slane %v186, 1
          %v269 = vrot.slane %v187, 1
          %v270 = vrot.slane %v188, 1
          %v271 = vrot.slane %v189, 1
          %v272 = vrot.slane %v190, 1
          %v273 = vrot.slane %v191, 1
          %vm290 = vcmask 1046528
          %v291 = vsel %vm290, %v258, %v258
          %v292 = vsel %vm290, %v259, %v259
          %v293 = vsel %vm290, %v260, %v260
          %v294 = vsel %vm290, %v261, %v261
          %v295 = vsel %vm290, %v262, %v262
          %v296 = vsel %vm290, %v263, %v263
          %v297 = vsel %vm290, %v264, %v264
          %v298 = vsel %vm290, %v265, %v265
          %v299 = vsel %vm290, %v266, %v266
          %v300 = vsel %vm290, %v267, %v267
          %v301 = vsel %vm290, %v268, %v268
          %v302 = vsel %vm290, %v269, %v269
          %v303 = vsel %vm290, %v270, %v270
          %v304 = vsel %vm290, %v271, %v271
          %v305 = vsel %vm290, %v272, %v272
          %v306 = vsel %vm290, %v273, %v273
          %307 = vrot.lane.b32.xlu0 %v192, 4
          %v308 = vpop.permute.xlu0 %307
          %309 = vrot.lane.b32.xlu0 %v177, 4
          %v310 = vpop.permute.xlu0 %309
          %311 = vrot.lane.b32.xlu0 %v178, 4
          %v312 = vpop.permute.xlu0 %311
          %313 = vrot.lane.b32.xlu0 %v179, 4
          %v314 = vpop.permute.xlu0 %313
          %315 = vrot.lane.b32.xlu0 %v180, 4
          %v316 = vpop.permute.xlu0 %315
          %317 = vrot.lane.b32.xlu0 %v181, 4
          %v318 = vpop.permute.xlu0 %317
          %319 = vrot.lane.b32.xlu0 %v182, 4
          %v320 = vpop.permute.xlu0 %319
          %321 = vrot.lane.b32.xlu0 %v183, 4
          %v322 = vpop.permute.xlu0 %321
          %323 = vrot.lane.b32.xlu0 %v184, 4
          %v324 = vpop.permute.xlu0 %323
          %325 = vrot.lane.b32.xlu0 %v185, 4
          %v326 = vpop.permute.xlu0 %325
          %327 = vrot.lane.b32.xlu0 %v186, 4
          %v328 = vpop.permute.xlu0 %327
          %329 = vrot.lane.b32.xlu0 %v187, 4
          %v330 = vpop.permute.xlu0 %329
          %331 = vrot.lane.b32.xlu0 %v188, 4
          %v332 = vpop.permute.xlu0 %331
          %333 = vrot.lane.b32.xlu0 %v189, 4
          %v334 = vpop.permute.xlu0 %333
          %335 = vrot.lane.b32.xlu0 %v190, 4
          %v336 = vpop.permute.xlu0 %335
          %337 = vrot.lane.b32.xlu0 %v191, 4
          %v338 = vpop.permute.xlu0 %337
          %371 = vrot.lane.b32.xlu0 %v291, 8
          %v372 = vpop.permute.xlu0 %371
          %373 = vrot.lane.b32.xlu0 %v292, 8
          %v374 = vpop.permute.xlu0 %373
          %375 = vrot.lane.b32.xlu0 %v293, 8
          %v376 = vpop.permute.xlu0 %375
          %377 = vrot.lane.b32.xlu0 %v294, 8
          %v378 = vpop.permute.xlu0 %377
          %379 = vrot.lane.b32.xlu0 %v295, 8
          %v380 = vpop.permute.xlu0 %379
          %381 = vrot.lane.b32.xlu0 %v296, 8
          %v382 = vpop.permute.xlu0 %381
          %383 = vrot.lane.b32.xlu0 %v297, 8
          %v384 = vpop.permute.xlu0 %383
          %385 = vrot.lane.b32.xlu0 %v298, 8
          %v386 = vpop.permute.xlu0 %385
          %387 = vrot.lane.b32.xlu0 %v299, 8
          %v388 = vpop.permute.xlu0 %387
          %389 = vrot.lane.b32.xlu0 %v300, 8
          %v390 = vpop.permute.xlu0 %389
          %391 = vrot.lane.b32.xlu0 %v301, 8
          %v392 = vpop.permute.xlu0 %391
          %393 = vrot.lane.b32.xlu0 %v302, 8
          %v394 = vpop.permute.xlu0 %393
          %395 = vrot.lane.b32.xlu0 %v303, 8
          %v396 = vpop.permute.xlu0 %395
          %397 = vrot.lane.b32.xlu0 %v304, 8
          %v398 = vpop.permute.xlu0 %397
          %399 = vrot.lane.b32.xlu0 %v305, 8
          %v400 = vpop.permute.xlu0 %399
          %401 = vrot.lane.b32.xlu0 %v306, 8
          %v402 = vpop.permute.xlu0 %401
          %435 = vrot.lane.b32.xlu0 %v243, 12
          %v436 = vpop.permute.xlu0 %435
          %437 = vrot.lane.b32.xlu0 %v244, 12
          %v438 = vpop.permute.xlu0 %437
          %439 = vrot.lane.b32.xlu0 %v245, 12
          %v440 = vpop.permute.xlu0 %439
          %441 = vrot.lane.b32.xlu0 %v246, 12
          %v442 = vpop.permute.xlu0 %441
          %443 = vrot.lane.b32.xlu0 %v247, 12
          %v444 = vpop.permute.xlu0 %443
          %445 = vrot.lane.b32.xlu0 %v248, 12
          %v446 = vpop.permute.xlu0 %445
          %447 = vrot.lane.b32.xlu0 %v249, 12
          %v448 = vpop.permute.xlu0 %447
          %449 = vrot.lane.b32.xlu0 %v250, 12
          %v450 = vpop.permute.xlu0 %449
          %451 = vrot.lane.b32.xlu0 %v251, 12
          %v452 = vpop.permute.xlu0 %451
          %453 = vrot.lane.b32.xlu0 %v252, 12
          %v454 = vpop.permute.xlu0 %453
          %455 = vrot.lane.b32.xlu0 %v253, 12
          %v456 = vpop.permute.xlu0 %455
          %457 = vrot.lane.b32.xlu0 %v254, 12
          %v458 = vpop.permute.xlu0 %457
          %459 = vrot.lane.b32.xlu0 %v255, 12
          %v460 = vpop.permute.xlu0 %459
          %461 = vrot.lane.b32.xlu0 %v256, 12
          %v462 = vpop.permute.xlu0 %461
          %463 = vrot.lane.b32.xlu0 %v257, 12
          %v464 = vpop.permute.xlu0 %463
          %465 = vrot.lane.b32.xlu0 %v242, 12
          %v466 = vpop.permute.xlu0 %465
          %483 = vrot.lane.b32.xlu0 %v177, 16
          %v484 = vpop.permute.xlu0 %483
          %485 = vrot.lane.b32.xlu0 %v178, 16
          %v486 = vpop.permute.xlu0 %485
          %487 = vrot.lane.b32.xlu0 %v179, 16
          %v488 = vpop.permute.xlu0 %487
          %489 = vrot.lane.b32.xlu0 %v180, 16
          %v490 = vpop.permute.xlu0 %489
          %491 = vrot.lane.b32.xlu0 %v181, 16
          %v492 = vpop.permute.xlu0 %491
          %493 = vrot.lane.b32.xlu0 %v182, 16
          %v494 = vpop.permute.xlu0 %493
          %495 = vrot.lane.b32.xlu0 %v183, 16
          %v496 = vpop.permute.xlu0 %495
          %497 = vrot.lane.b32.xlu0 %v184, 16
          %v498 = vpop.permute.xlu0 %497
          %499 = vrot.lane.b32.xlu0 %v185, 16
          %v500 = vpop.permute.xlu0 %499
          %501 = vrot.lane.b32.xlu0 %v186, 16
          %v502 = vpop.permute.xlu0 %501
          %503 = vrot.lane.b32.xlu0 %v187, 16
          %v504 = vpop.permute.xlu0 %503
          %505 = vrot.lane.b32.xlu0 %v188, 16
          %v506 = vpop.permute.xlu0 %505
          %507 = vrot.lane.b32.xlu0 %v189, 16
          %v508 = vpop.permute.xlu0 %507
          %509 = vrot.lane.b32.xlu0 %v190, 16
          %v510 = vpop.permute.xlu0 %509
          %511 = vrot.lane.b32.xlu0 %v191, 16
          %v512 = vpop.permute.xlu0 %511
          %513 = vrot.lane.b32.xlu0 %v192, 16
          %v514 = vpop.permute.xlu0 %513
          %531 = vrot.lane.b32.xlu0 %v292, 20
          %v532 = vpop.permute.xlu0 %531
          %533 = vrot.lane.b32.xlu0 %v293, 20
          %v534 = vpop.permute.xlu0 %533
          %535 = vrot.lane.b32.xlu0 %v294, 20
          %v536 = vpop.permute.xlu0 %535
          %537 = vrot.lane.b32.xlu0 %v295, 20
          %v538 = vpop.permute.xlu0 %537
          %539 = vrot.lane.b32.xlu0 %v296, 20
          %v540 = vpop.permute.xlu0 %539
          %541 = vrot.lane.b32.xlu0 %v297, 20
          %v542 = vpop.permute.xlu0 %541
          %543 = vrot.lane.b32.xlu0 %v298, 20
          %v544 = vpop.permute.xlu0 %543
          %545 = vrot.lane.b32.xlu0 %v299, 20
          %v546 = vpop.permute.xlu0 %545
          %547 = vrot.lane.b32.xlu0 %v300, 20
          %v548 = vpop.permute.xlu0 %547
          %549 = vrot.lane.b32.xlu0 %v301, 20
          %v550 = vpop.permute.xlu0 %549
          %551 = vrot.lane.b32.xlu0 %v302, 20
          %v552 = vpop.permute.xlu0 %551
          %553 = vrot.lane.b32.xlu0 %v303, 20
          %v554 = vpop.permute.xlu0 %553
          %555 = vrot.lane.b32.xlu0 %v304, 20
          %v556 = vpop.permute.xlu0 %555
          %557 = vrot.lane.b32.xlu0 %v305, 20
          %v558 = vpop.permute.xlu0 %557
          %559 = vrot.lane.b32.xlu0 %v306, 20
          %v560 = vpop.permute.xlu0 %559
          %561 = vrot.lane.b32.xlu0 %v291, 20
          %v562 = vpop.permute.xlu0 %561
          %579 = vrot.lane.b32.xlu0 %v244, 24
          %v580 = vpop.permute.xlu0 %579
          %581 = vrot.lane.b32.xlu0 %v245, 24
          %v582 = vpop.permute.xlu0 %581
          %583 = vrot.lane.b32.xlu0 %v246, 24
          %v584 = vpop.permute.xlu0 %583
          %585 = vrot.lane.b32.xlu0 %v247, 24
          %v586 = vpop.permute.xlu0 %585
          %587 = vrot.lane.b32.xlu0 %v248, 24
          %v588 = vpop.permute.xlu0 %587
          %589 = vrot.lane.b32.xlu0 %v249, 24
          %v590 = vpop.permute.xlu0 %589
          %591 = vrot.lane.b32.xlu0 %v250, 24
          %v592 = vpop.permute.xlu0 %591
          %593 = vrot.lane.b32.xlu0 %v251, 24
          %v594 = vpop.permute.xlu0 %593
          %595 = vrot.lane.b32.xlu0 %v252, 24
          %v596 = vpop.permute.xlu0 %595
          %597 = vrot.lane.b32.xlu0 %v253, 24
          %v598 = vpop.permute.xlu0 %597
          %599 = vrot.lane.b32.xlu0 %v254, 24
          %v600 = vpop.permute.xlu0 %599
          %601 = vrot.lane.b32.xlu0 %v255, 24
          %v602 = vpop.permute.xlu0 %601
          %603 = vrot.lane.b32.xlu0 %v256, 24
          %v604 = vpop.permute.xlu0 %603
          %605 = vrot.lane.b32.xlu0 %v257, 24
          %v606 = vpop.permute.xlu0 %605
          %607 = vrot.lane.b32.xlu0 %v242, 24
          %v608 = vpop.permute.xlu0 %607
          %609 = vrot.lane.b32.xlu0 %v243, 24
          %v610 = vpop.permute.xlu0 %609
          %627 = vrot.lane.b32.xlu0 %v178, 28
          %v628 = vpop.permute.xlu0 %627
          %629 = vrot.lane.b32.xlu0 %v179, 28
          %v630 = vpop.permute.xlu0 %629
          %631 = vrot.lane.b32.xlu0 %v180, 28
          %v632 = vpop.permute.xlu0 %631
          %633 = vrot.lane.b32.xlu0 %v181, 28
          %v634 = vpop.permute.xlu0 %633
          %635 = vrot.lane.b32.xlu0 %v182, 28
          %v636 = vpop.permute.xlu0 %635
          %637 = vrot.lane.b32.xlu0 %v183, 28
          %v638 = vpop.permute.xlu0 %637
          %639 = vrot.lane.b32.xlu0 %v184, 28
          %v640 = vpop.permute.xlu0 %639
          %641 = vrot.lane.b32.xlu0 %v185, 28
          %v642 = vpop.permute.xlu0 %641
          %643 = vrot.lane.b32.xlu0 %v186, 28
          %v644 = vpop.permute.xlu0 %643
          %645 = vrot.lane.b32.xlu0 %v187, 28
          %v646 = vpop.permute.xlu0 %645
          %647 = vrot.lane.b32.xlu0 %v188, 28
          %v648 = vpop.permute.xlu0 %647
          %649 = vrot.lane.b32.xlu0 %v189, 28
          %v650 = vpop.permute.xlu0 %649
          %651 = vrot.lane.b32.xlu0 %v190, 28
          %v652 = vpop.permute.xlu0 %651
          %653 = vrot.lane.b32.xlu0 %v191, 28
          %v654 = vpop.permute.xlu0 %653
          %655 = vrot.lane.b32.xlu0 %v192, 28
          %v656 = vpop.permute.xlu0 %655
          %657 = vrot.lane.b32.xlu0 %v177, 28
          %v658 = vpop.permute.xlu0 %657
          %675 = vrot.lane.b32.xlu0 %v293, 32
          %v676 = vpop.permute.xlu0 %675
          %677 = vrot.lane.b32.xlu0 %v294, 32
          %v678 = vpop.permute.xlu0 %677
          %679 = vrot.lane.b32.xlu0 %v295, 32
          %v680 = vpop.permute.xlu0 %679
          %681 = vrot.lane.b32.xlu0 %v296, 32
          %v682 = vpop.permute.xlu0 %681
          %683 = vrot.lane.b32.xlu0 %v297, 32
          %v684 = vpop.permute.xlu0 %683
          %685 = vrot.lane.b32.xlu0 %v298, 32
          %v686 = vpop.permute.xlu0 %685
          %687 = vrot.lane.b32.xlu0 %v299, 32
          %v688 = vpop.permute.xlu0 %687
          %689 = vrot.lane.b32.xlu0 %v300, 32
          %v690 = vpop.permute.xlu0 %689
          %691 = vrot.lane.b32.xlu0 %v301, 32
          %v692 = vpop.permute.xlu0 %691
          %693 = vrot.lane.b32.xlu0 %v302, 32
          %v694 = vpop.permute.xlu0 %693
          %695 = vrot.lane.b32.xlu0 %v303, 32
          %v696 = vpop.permute.xlu0 %695
          %697 = vrot.lane.b32.xlu0 %v304, 32
          %v698 = vpop.permute.xlu0 %697
          %699 = vrot.lane.b32.xlu0 %v305, 32
          %v700 = vpop.permute.xlu0 %699
          %701 = vrot.lane.b32.xlu0 %v306, 32
          %v702 = vpop.permute.xlu0 %701
          %703 = vrot.lane.b32.xlu0 %v291, 32
          %v704 = vpop.permute.xlu0 %703
          %705 = vrot.lane.b32.xlu0 %v292, 32
          %v706 = vpop.permute.xlu0 %705
          %vm723 = vcmask 31744
          %v724 = vsel %vm723, %v242, %v308
          %v725 = vsel %vm723, %v243, %v310
          %v726 = vsel %vm723, %v244, %v312
          %v727 = vsel %vm723, %v245, %v314
          %v728 = vsel %vm723, %v246, %v316
          %v729 = vsel %vm723, %v247, %v318
          %v730 = vsel %vm723, %v248, %v320
          %v731 = vsel %vm723, %v249, %v322
          %v732 = vsel %vm723, %v250, %v324
          %v733 = vsel %vm723, %v251, %v326
          %v734 = vsel %vm723, %v252, %v328
          %v735 = vsel %vm723, %v253, %v330
          %v736 = vsel %vm723, %v254, %v332
          %v737 = vsel %vm723, %v255, %v334
          %v738 = vsel %vm723, %v256, %v336
          %v739 = vsel %vm723, %v257, %v338
          %vm740 = vcmask 64512
          %v741 = vsel %vm740, %v724, %v372
          %v742 = vsel %vm740, %v725, %v374
          %v743 = vsel %vm740, %v726, %v376
          %v744 = vsel %vm740, %v727, %v378
          %v745 = vsel %vm740, %v728, %v380
          %v746 = vsel %vm740, %v729, %v382
          %v747 = vsel %vm740, %v730, %v384
          %v748 = vsel %vm740, %v731, %v386
          %v749 = vsel %vm740, %v732, %v388
          %v750 = vsel %vm740, %v733, %v390
          %v751 = vsel %vm740, %v734, %v392
          %v752 = vsel %vm740, %v735, %v394
          %v753 = vsel %vm740, %v736, %v396
          %v754 = vsel %vm740, %v737, %v398
          %v755 = vsel %vm740, %v738, %v400
          %v756 = vsel %vm740, %v739, %v402
          %vm757 = vcmask 97280
          %v758 = vsel %vm757, %v741, %v436
          %v759 = vsel %vm757, %v742, %v438
          %v760 = vsel %vm757, %v743, %v440
          %v761 = vsel %vm757, %v744, %v442
          %v762 = vsel %vm757, %v745, %v444
          %v763 = vsel %vm757, %v746, %v446
          %v764 = vsel %vm757, %v747, %v448
          %v765 = vsel %vm757, %v748, %v450
          %v766 = vsel %vm757, %v749, %v452
          %v767 = vsel %vm757, %v750, %v454
          %v768 = vsel %vm757, %v751, %v456
          %v769 = vsel %vm757, %v752, %v458
          %v770 = vsel %vm757, %v753, %v460
          %v771 = vsel %vm757, %v754, %v462
          %v772 = vsel %vm757, %v755, %v464
          %v773 = vsel %vm757, %v756, %v466
          %vm774 = vcmask 130048
          %v775 = vsel %vm774, %v758, %v484
          %v776 = vsel %vm774, %v759, %v486
          %v777 = vsel %vm774, %v760, %v488
          %v778 = vsel %vm774, %v761, %v490
          %v779 = vsel %vm774, %v762, %v492
          %v780 = vsel %vm774, %v763, %v494
          %v781 = vsel %vm774, %v764, %v496
          %v782 = vsel %vm774, %v765, %v498
          %v783 = vsel %vm774, %v766, %v500
          %v784 = vsel %vm774, %v767, %v502
          %v785 = vsel %vm774, %v768, %v504
          %v786 = vsel %vm774, %v769, %v506
          %v787 = vsel %vm774, %v770, %v508
          %v788 = vsel %vm774, %v771, %v510
          %v789 = vsel %vm774, %v772, %v512
          %v790 = vsel %vm774, %v773, %v514
          %vm791 = vcmask 162816
          %v792 = vsel %vm791, %v775, %v532
          %v793 = vsel %vm791, %v776, %v534
          %v794 = vsel %vm791, %v777, %v536
          %v795 = vsel %vm791, %v778, %v538
          %v796 = vsel %vm791, %v779, %v540
          %v797 = vsel %vm791, %v780, %v542
          %v798 = vsel %vm791, %v781, %v544
          %v799 = vsel %vm791, %v782, %v546
          %v800 = vsel %vm791, %v783, %v548
          %v801 = vsel %vm791, %v784, %v550
          %v802 = vsel %vm791, %v785, %v552
          %v803 = vsel %vm791, %v786, %v554
          %v804 = vsel %vm791, %v787, %v556
          %v805 = vsel %vm791, %v788, %v558
          %v806 = vsel %vm791, %v789, %v560
          %v807 = vsel %vm791, %v790, %v562
          %vm808 = vcmask 195584
          %v809 = vsel %vm808, %v792, %v580
          %v810 = vsel %vm808, %v793, %v582
          %v811 = vsel %vm808, %v794, %v584
          %v812 = vsel %vm808, %v795, %v586
          %v813 = vsel %vm808, %v796, %v588
          %v814 = vsel %vm808, %v797, %v590
          %v815 = vsel %vm808, %v798, %v592
          %v816 = vsel %vm808, %v799, %v594
          %v817 = vsel %vm808, %v800, %v596
          %v818 = vsel %vm808, %v801, %v598
          %v819 = vsel %vm808, %v802, %v600
          %v820 = vsel %vm808, %v803, %v602
          %v821 = vsel %vm808, %v804, %v604
          %v822 = vsel %vm808, %v805, %v606
          %v823 = vsel %vm808, %v806, %v608
          %v824 = vsel %vm808, %v807, %v610
          %vm825 = vcmask 228352
          %v826 = vsel %vm825, %v809, %v628
          %v827 = vsel %vm825, %v810, %v630
          %v828 = vsel %vm825, %v811, %v632
          %v829 = vsel %vm825, %v812, %v634
          %v830 = vsel %vm825, %v813, %v636
          %v831 = vsel %vm825, %v814, %v638
          %v832 = vsel %vm825, %v815, %v640
          %v833 = vsel %vm825, %v816, %v642
          %v834 = vsel %vm825, %v817, %v644
          %v835 = vsel %vm825, %v818, %v646
          %v836 = vsel %vm825, %v819, %v648
          %v837 = vsel %vm825, %v820, %v650
          %v838 = vsel %vm825, %v821, %v652
          %v839 = vsel %vm825, %v822, %v654
          %v840 = vsel %vm825, %v823, %v656
          %v841 = vsel %vm825, %v824, %v658
          %vm842 = vcmask 261120
          %v843 = vsel %vm842, %v826, %v676
          %v844 = vsel %vm842, %v827, %v678
          %v845 = vsel %vm842, %v828, %v680
          %v846 = vsel %vm842, %v829, %v682
          %v847 = vsel %vm842, %v830, %v684
          %v848 = vsel %vm842, %v831, %v686
          %v849 = vsel %vm842, %v832, %v688
          %v850 = vsel %vm842, %v833, %v690
          %v851 = vsel %vm842, %v834, %v692
          %v852 = vsel %vm842, %v835, %v694
          %v853 = vsel %vm842, %v836, %v696
          %v854 = vsel %vm842, %v837, %v698
          %v855 = vsel %vm842, %v838, %v700
          %v856 = vsel %vm842, %v839, %v702
          %v857 = vsel %vm842, %v840, %v704
          %v858 = vsel %vm842, %v841, %v706
          %vm859 = vcmask 293888
          %v860 = vsel %vm859, %v843, 0.0
          %v861 = vsel %vm859, %v844, 0.0
          %v862 = vsel %vm859, %v845, 0.0
          %v863 = vsel %vm859, %v846, 0.0
          %v864 = vsel %vm859, %v847, 0.0
          %v865 = vsel %vm859, %v848, 0.0
          %v866 = vsel %vm859, %v849, 0.0
          %v867 = vsel %vm859, %v850, 0.0
          %v868 = vsel %vm859, %v851, 0.0
          %v869 = vsel %vm859, %v852, 0.0
          %v870 = vsel %vm859, %v853, 0.0
          %v871 = vsel %vm859, %v854, 0.0
          %v872 = vsel %vm859, %v855, 0.0
          %v873 = vsel %vm859, %v856, 0.0
          %v874 = vsel %vm859, %v857, 0.0
          %v875 = vsel %vm859, %v858, 0.0
          %876 = vst [vmem:[#allocation2] sm:$0xff] %v860
          %877 = vst [vmem:[#allocation2 + $0x8] sm:$0xff] %v861
          %878 = vst [vmem:[#allocation2 + $0x10] sm:$0xff] %v862
          %879 = vst [vmem:[#allocation2 + $0x18] sm:$0xff] %v863
          %880 = vst [vmem:[#allocation2 + $0x20] sm:$0xff] %v864
          %881 = vst [vmem:[#allocation2 + $0x28] sm:$0xff] %v865
          %882 = vst [vmem:[#allocation2 + $0x30] sm:$0xff] %v866
          %883 = vst [vmem:[#allocation2 + $0x38] sm:$0xff] %v867
          %884 = vst [vmem:[#allocation2 + $0x40] sm:$0xff] %v868
          %885 = vst [vmem:[#allocation2 + $0x48] sm:$0xff] %v869
          %886 = vst [vmem:[#allocation2 + $0x50] sm:$0xff] %v870
          %887 = vst [vmem:[#allocation2 + $0x58] sm:$0xff] %v871
          %888 = vst [vmem:[#allocation2 + $0x60] sm:$0xff] %v872
          %889 = vst [vmem:[#allocation2 + $0x68] sm:$0xff] %v873
          %890 = vst [vmem:[#allocation2 + $0x70] sm:$0xff] %v874
          %891 = vst [vmem:[#allocation2 + $0x78] sm:$0xff] %v875
        $region32: #{tpu_custom_call.1} parent=27 // pred_fallthru
          _
        %v892 = vld [vmem:[#allocation2] sm:$0xff]
        %v893 = vld [vmem:[#allocation2 + $0x8] sm:$0xff]
        %v894 = vld [vmem:[#allocation2 + $0x10] sm:$0xff]
        %v895 = vld [vmem:[#allocation2 + $0x18] sm:$0xff]
        %v896 = vld [vmem:[#allocation2 + $0x20] sm:$0xff]
        %v897 = vld [vmem:[#allocation2 + $0x28] sm:$0xff]
        %v898 = vld [vmem:[#allocation2 + $0x30] sm:$0xff]
        %v899 = vld [vmem:[#allocation2 + $0x38] sm:$0xff]
        %v900 = vld [vmem:[#allocation2 + $0x40] sm:$0xff]
        %v901 = vld [vmem:[#allocation2 + $0x48] sm:$0xff]
        %v902 = vld [vmem:[#allocation2 + $0x50] sm:$0xff]
        %v903 = vld [vmem:[#allocation2 + $0x58] sm:$0xff]
        %v904 = vld [vmem:[#allocation2 + $0x60] sm:$0xff]
        %v905 = vld [vmem:[#allocation2 + $0x68] sm:$0xff]
        %v906 = vld [vmem:[#allocation2 + $0x70] sm:$0xff]
        %v907 = vld [vmem:[#allocation2 + $0x78] sm:$0xff]
        %v908 = vld [vmem:[%s172] sm:$0xff]
        %v909 = vld [vmem:[%s172 + $0x8] sm:$0xff]
        %v910 = vld [vmem:[%s172 + $0x10] sm:$0xff]
        %v911 = vld [vmem:[%s172 + $0x18] sm:$0xff]
        %v912 = vld [vmem:[%s172 + $0x20] sm:$0xff]
        %v913 = vld [vmem:[%s172 + $0x28] sm:$0xff]
        %v914 = vld [vmem:[%s172 + $0x30] sm:$0xff]
        %v915 = vld [vmem:[%s172 + $0x38] sm:$0xff]
        %v916 = vld [vmem:[%s172 + $0x40] sm:$0xff]
        %v917 = vld [vmem:[%s172 + $0x48] sm:$0xff]
        %v918 = vld [vmem:[%s172 + $0x50] sm:$0xff]
        %v919 = vld [vmem:[%s172 + $0x58] sm:$0xff]
        %v920 = vld [vmem:[%s172 + $0x60] sm:$0xff]
        %v921 = vld [vmem:[%s172 + $0x68] sm:$0xff]
        %v922 = vld [vmem:[%s172 + $0x70] sm:$0xff]
        %v923 = vld [vmem:[%s172 + $0x78] sm:$0xff]
        %924 = vmatpush.msra.mxu0 %v923
        %925 = vmatpush.msra.mxu0 %v922
        %926 = vmatpush.msra.mxu0 %v921
        %927 = vmatpush.msra.mxu0 %v920
        %928 = vmatpush.msra.mxu0 %v919
        %929 = vmatpush.msra.mxu0 %v918
        %930 = vmatpush.msra.mxu0 %v917
        %931 = vmatpush.msra.mxu0 %v916
        %932 = vmatpush.msra.mxu0 %v915
        %933 = vmatpush.msra.mxu0 %v914
        %934 = vmatpush.msra.mxu0 %v913
        %935 = vmatpush.msra.mxu0 %v912
        %936 = vmatpush.msra.mxu0 %v911
        %937 = vmatpush.msra.mxu0 %v910
        %938 = vmatpush.msra.mxu0 %v909
        %939 = vmatpush.msra.mxu0 %v908
        %940 = vmatmul.f32.gmra.mxu0 %v892
        %v941 = vpop.f32.mrf.mxu0
        %v942 = vadd.f32 0.0, %v941
        %943 = vmatmul.f32.gmra.mxu0 %v893
        %v944 = vpop.f32.mrf.mxu0
        %v945 = vadd.f32 0.0, %v944
        %946 = vmatmul.f32.gmra.mxu0 %v894
        %v947 = vpop.f32.mrf.mxu0
        %v948 = vadd.f32 0.0, %v947
        %949 = vmatmul.f32.gmra.mxu0 %v895
        %v950 = vpop.f32.mrf.mxu0
        %v951 = vadd.f32 0.0, %v950
        %952 = vmatmul.f32.gmra.mxu0 %v896
        %v953 = vpop.f32.mrf.mxu0
        %v954 = vadd.f32 0.0, %v953
        %955 = vmatmul.f32.gmra.mxu0 %v897
        %v956 = vpop.f32.mrf.mxu0
        %v957 = vadd.f32 0.0, %v956
        %958 = vmatmul.f32.gmra.mxu0 %v898
        %v959 = vpop.f32.mrf.mxu0
        %v960 = vadd.f32 0.0, %v959
        %961 = vmatmul.f32.gmra.mxu0 %v899
        %v962 = vpop.f32.mrf.mxu0
        %v963 = vadd.f32 0.0, %v962
        %964 = vmatmul.f32.gmra.mxu0 %v900
        %v965 = vpop.f32.mrf.mxu0
        %v966 = vadd.f32 0.0, %v965
        %967 = vmatmul.f32.gmra.mxu0 %v901
        %v968 = vpop.f32.mrf.mxu0
        %v969 = vadd.f32 0.0, %v968
        %970 = vmatmul.f32.gmra.mxu0 %v902
        %v971 = vpop.f32.mrf.mxu0
        %v972 = vadd.f32 0.0, %v971
        %973 = vmatmul.f32.gmra.mxu0 %v903
        %v974 = vpop.f32.mrf.mxu0
        %v975 = vadd.f32 0.0, %v974
        %976 = vmatmul.f32.gmra.mxu0 %v904
        %v977 = vpop.f32.mrf.mxu0
        %v978 = vadd.f32 0.0, %v977
        %979 = vmatmul.f32.gmra.mxu0 %v905
        %v980 = vpop.f32.mrf.mxu0
        %v981 = vadd.f32 0.0, %v980
        %982 = vmatmul.f32.gmra.mxu0 %v906
        %v983 = vpop.f32.mrf.mxu0
        %v984 = vadd.f32 0.0, %v983
        %985 = vmatmul.f32.gmra.mxu0 %v907
        %v986 = vpop.f32.mrf.mxu0
        %v987 = vadd.f32 0.0, %v986
        %988 = vdwg.mxu0
        %989 = vst [vmem:[%s163] sm:$0xff] %v942
        %990 = vst [vmem:[%s163 + $0x8] sm:$0xff] %v945
        %991 = vst [vmem:[%s163 + $0x10] sm:$0xff] %v948
        %992 = vst [vmem:[%s163 + $0x18] sm:$0xff] %v951
        %993 = vst [vmem:[%s163 + $0x20] sm:$0xff] %v954
        %994 = vst [vmem:[%s163 + $0x28] sm:$0xff] %v957
        %995 = vst [vmem:[%s163 + $0x30] sm:$0xff] %v960
        %996 = vst [vmem:[%s163 + $0x38] sm:$0xff] %v963
        %997 = vst [vmem:[%s163 + $0x40] sm:$0xff] %v966
        %998 = vst [vmem:[%s163 + $0x48] sm:$0xff] %v969
        %999 = vst [vmem:[%s163 + $0x50] sm:$0xff] %v972
        %1000 = vst [vmem:[%s163 + $0x58] sm:$0xff] %v975
        %1001 = vst [vmem:[%s163 + $0x60] sm:$0xff] %v978
        %1002 = vst [vmem:[%s163 + $0x68] sm:$0xff] %v981
        %1003 = vst [vmem:[%s163 + $0x70] sm:$0xff] %v984
        %1004 = vst [vmem:[%s163 + $0x78] sm:$0xff] %v987
        %s1005 = sand.u32 %s90, 1
        %s1006 = scalar_lea.sflag [#allocation4], %s1005
        %s1007 = sand.u32 %s90, 1
        %s1008 = smul.addr %s1007, 128
        %s1009 = scalar_lea.vmem [#allocation3], %s1008
        // Predicated region
        $region33: #{tpu_custom_call.1} parent=27 // pred_check
          %p1010 = pneg %p100
        $region34: #{tpu_custom_call.1} parent=27 // pred_check_branch
          %1012 = sbr.rel (%p1010) target = $region36
        $region35: #{tpu_custom_call.1} parent=27 // pred_region
          %1014 = vsyncadd %s1006, 0
          %s1015 = smul.addr %s20, 16
          %s1016 = sadd.s32 %s21, %s1015
          %s1017 = smul.addr %s1016, 8
          %s1018 = scalar_lea.hbm %s2, %s1017
          %s1019 = sshll.u32 %s1009, 4
          %s1020 = int_to_ptr.vmem [resolvable:$true] %s1019
          %s1021 = sshll.u32 %s1018, 4
          %s1022 = int_to_ptr.hbm [resolvable:$true] %s1021
          %1027 = dma.vmem_to_hbm [thread:$0]  %s1020, 2048, %s1022, %s1006, 128, 128, 8
        $region36: #{tpu_custom_call.1} parent=27 // pred_fallthru
          _
      $region28: #{tpu_custom_call.1} parent=5 // pred_fallthru
        _
      %p1028 = scmp.le.s32.totalorder 2, %s11
      // Predicated region
      $region37: #{tpu_custom_call.1} parent=5 // pred_check
        %p1029 = pneg %p1028
      $region38: #{tpu_custom_call.1} parent=5 // pred_check_branch
        %1031 = sbr.rel (%p1029) target = $region40
      $region39: #{tpu_custom_call.1} parent=5 // pred_region
        %s1032 = ssub.s32 %s11, 2
        // Predicated region
        $region41: #{tpu_custom_call.1} parent=39 // pred_check
          %p1033 = pneg %p106
        $region42: #{tpu_custom_call.1} parent=39 // pred_check_branch
          %1035 = sbr.rel (%p1033) target = $region44
        $region43: #{tpu_custom_call.1} parent=39 // pred_region
          %s1036 = sand.u32 %s91, 1
          %s1037 = scalar_lea.sflag [#allocation4], %s1036
          %s1038 = sand.u32 %s91, 1
          %s1039 = smul.addr %s1038, 128
          %s1040 = scalar_lea.vmem [#allocation3], %s1039
          %1042 = dma.done %s1037, 2048
        $region44: #{tpu_custom_call.1} parent=39 // pred_fallthru
          _
      $region40: #{tpu_custom_call.1} parent=5 // pred_fallthru
        _
    $region6: #{tpu_custom_call.1} parent=1 // loop_footer
      %s15 = sadd.s32 1, %s11
    $region7: #{tpu_custom_call.1} parent=1 // loop_footer_branch
      %10 = sbr.rel target = $region3
    $region8: #{tpu_custom_call.1} parent=1 // loop_exit
      _
    %1043 = vsyncpa [#allocation4], 1
    %s1044 = scalar_lea.sflag [#allocation4], 1
    %1045 = vsyncpa %s1044, 1

</llo_original>
